<compile_context>
chip_gen: v5e
topology: v5e:2x2
jax: 0.10.0
libtpu: 0.0.40
codegen_flags: <defaults>
</compile_context>

<pallas_src>
import functools

import jax
import jax.numpy as jnp
from jax.experimental import pallas as pl
from jax.experimental.pallas import tpu as pltpu


def _normalize_kernel(x_ref, o_ref, *, power: int):
    # x_ref block: (block_b, D) -- full feature dim resident in VMEM.
    x = x_ref[...].astype(jnp.float32)

    if power == 2:
        s = jnp.sum(x * x, axis=1, keepdims=True)       # (block_b, 1)
        inv_norm = jax.lax.rsqrt(s)                      # one rsqrt per row (EUP, cheap)
    else:
        # Small integer power via repeated VPU multiplies (no exp/log path, no NaN
        # for negative inputs where the math is defined).
        xp = x
        for _ in range(power - 1):
            xp = xp * x
        s = jnp.sum(xp, axis=1, keepdims=True)
        norm = s ** (1.0 / power)
        inv_norm = pl.reciprocal(norm, approx=True)

    # Broadcast multiply on the VPU instead of a per-element divide.
    # NOTE: like the original module, an all-zero row yields inf/NaN (no eps clamp).
    o_ref[...] = (x * inv_norm).astype(o_ref.dtype)


def _choose_block_b(B: int, D: int, itemsize: int) -> int:
    """Pick a batch tile: sublane-aligned, <=1024 rows, ~2 MiB per block buffer."""
    sublane = max(8, 32 // max(1, itemsize))       # 8 for f32, 16 for bf16, 32 for int8
    budget_bytes = 2 * 1024 * 1024                 # per-block buffer budget
    rows_by_bytes = max(sublane, budget_bytes // max(1, D * itemsize))
    blk = min(B, 1024, rows_by_bytes)
    blk = max(sublane, (blk // sublane) * sublane)  # round down to sublane multiple
    return blk


def normalize(x: jax.Array, power: int = 2, block_b: int | None = None) -> jax.Array:
    """Lp-normalize x (shape (B, D)) along axis 1, matching the PyTorch module."""
    assert x.ndim == 2, "expected (batch, features)"
    assert isinstance(power, int) and power >= 1, "integer power expected"
    B, D = x.shape
    itemsize = jnp.dtype(x.dtype).itemsize

    if block_b is None:
        block_b = _choose_block_b(B, D, itemsize)

    # Pad the batch up to a multiple of block_b (padded rows are discarded after).
    n_steps = -(-B // block_b)
    Bp = n_steps * block_b
    x_in = jnp.pad(x, ((0, Bp - B), (0, 0))) if Bp != B else x

    kernel = functools.partial(_normalize_kernel, power=power)

    out = pl.pallas_call(
        kernel,
        out_shape=jax.ShapeDtypeStruct((Bp, D), x.dtype),
        grid_spec=pltpu.PrefetchScalarGridSpec(
            num_scalar_prefetch=0,
            grid=(n_steps,),
            in_specs=[pl.BlockSpec((block_b, D), lambda i: (i, 0))],
            out_specs=pl.BlockSpec((block_b, D), lambda i: (i, 0)),
        ),
        compiler_params=pltpu.CompilerParams(
            dimension_semantics=("parallel",),
            vmem_limit_bytes=32 * 1024 * 1024,
        ),
    )(x_in)

    if Bp != B:
        out = out[:B]
    return out


def normalize_ref(x: jax.Array, power: int = 2) -> jax.Array:
    """Pure-JAX reference of the PyTorch forward."""
    xf = x.astype(jnp.float32)
    norm = jnp.sum(xf ** power, axis=1, keepdims=True) ** (1.0 / power)
    return (xf / norm).astype(x.dtype)


if __name__ == "__main__":
    key = jax.random.PRNGKey(0)

    # 1) The module normalizes projection-head embeddings: (batch, hidden).
    B, D = 8, 32
    x = jax.random.normal(key, (B, D), dtype=jnp.float32)
    out = normalize(x, power=2)
    jax.block_until_ready(out)
    ref = normalize_ref(x, power=2)
    assert out.shape == (B, D) and out.dtype == x.dtype
    assert jnp.allclose(out, ref, atol=1e-5, rtol=1e-5), "mismatch vs reference (small)"

    # 2) Multi-step grid + batch-padding path.
    k2 = jax.random.PRNGKey(1)
    B2, D2 = 100, 256
    x2 = jax.random.normal(k2, (B2, D2), dtype=jnp.float32)
    out2 = normalize(x2, power=2, block_b=48)   # forces grid of 3 with padding
    jax.block_until_ready(out2)
    ref2 = normalize_ref(x2, power=2)
    assert out2.shape == (B2, D2)
    assert jnp.allclose(out2, ref2, atol=1e-5, rtol=1e-5), "mismatch vs reference (tiled)"

    print("KERNEL_OK")
</pallas_src>

<mosaic_0001>
module attributes {stable_mosaic.version = 11 : i64} {
  func.func @_normalize_kernel(%arg0: i32, %arg1: memref<8x32xf32, #tpu.memory_space<vmem>>, %arg2: memref<8x32xf32, #tpu.memory_space<vmem>>) attributes {dimension_semantics = [#tpu.dimension_semantics<parallel>], iteration_bounds = array<i64: 1>, scalar_prefetch = 0 : i64, scratch_operands = 0 : i64, tpu.core_type = #tpu.core_type<tc>, window_params = [{transform_indices = @transform_0, window_bounds = array<i64: 8, 32>}, {transform_indices = @transform_1, window_bounds = array<i64: 8, 32>}]} {
    %c0 = arith.constant 0 : index
    %c0_0 = arith.constant 0 : index
    %0 = vector.load %arg1[%c0, %c0_0] : memref<8x32xf32, #tpu.memory_space<vmem>>, vector<8x32xf32>
    %1 = arith.mulf %0, %0 : vector<8x32xf32>
    %cst = arith.constant dense<0.000000e+00> : vector<8xf32>
    %2 = vector.multi_reduction <add>, %1, %cst [1] : vector<8x32xf32> to vector<8xf32>
    %3 = vector.shape_cast %2 : vector<8xf32> to vector<8x1xf32>
    %4 = math.rsqrt %3 : vector<8x1xf32>
    %5 = vector.broadcast %4 : vector<8x1xf32> to vector<8x32xf32>
    %6 = arith.mulf %0, %5 : vector<8x32xf32>
    %c0_1 = arith.constant 0 : index
    %c0_2 = arith.constant 0 : index
    %7 = vector.load %arg2[%c0_1, %c0_2] : memref<8x32xf32, #tpu.memory_space<vmem>>, vector<8x32xf32>
    tpu.vector_store %arg2[%c0_1, %c0_2], %6 {strides = array<i32>} : memref<8x32xf32, #tpu.memory_space<vmem>>, vector<8x32xf32>,
    return
  }
  func.func @transform_0(%arg0: i32) -> (i32, i32) {
    %c0_i32 = arith.constant 0 : i32
    %c0_i32_0 = arith.constant 0 : i32
    return %arg0, %c0_i32 : i32, i32
  }
  func.func @transform_1(%arg0: i32) -> (i32, i32) {
    %c0_i32 = arith.constant 0 : i32
    %c0_i32_0 = arith.constant 0 : i32
    return %arg0, %c0_i32 : i32, i32
  }
}

</mosaic_0001>

<llo_original>
// kernel: tpu_custom_call.1
$region0: #{tpu_custom_call.1}
  #allocation0 [shape = 'u32[]', space=smem, size = 0x4, offset = 0x4, fixed_abs, tag = 'smem constant byte address 0x4 - core index']
  #allocation1 [shape = 'u32[72,128]{1,0:T(1,128)}', space=vmem, size = 0x9000, scoped, tag = 'internal scratch']
  %s0 = inlined_call_operand.hbm [shape: f32[8,32], index: 0, kind: input, shape index: {}]
  %s1 = inlined_call_operand.hbm [shape: f32[8,32], index: 1, kind: output, shape index: {}]
  %s2 = sld [smem:[#allocation0]]
  $region18: #{tpu_custom_call.1} parent=0
    _
  %s4 = ssub.s32 1, %s2
  %s5 = scalar_select 0, %s4, %s2
  $region1: #{tpu_custom_call.1} parent=0
    #allocation2 [shape = 'u8[4096]{0}', space=vmem, size = 0x1000, scoped, tag = 'input window, operand 0, single buffered']
    #allocation3 [shape = 's32[1]{0}', space=sflag, size = 0x4, scoped, tag = 'scoped memory for tpu_custom_call.1']
    #allocation4 [shape = 's32[1]{0}', space=sflag, size = 0x4, scoped, tag = 'scoped memory for tpu_custom_call.1']
    #allocation5 [shape = 'u8[4096]{0}', space=vmem, size = 0x1000, scoped, tag = 'output window, operand 0, single buffered']
    %6 = vsyncpa [#allocation3], 0
    %7 = vsyncpa [#allocation4], 0
    // Predicated region
    $region2: #{tpu_custom_call.1} parent=1 // pred_check
      _
    $region3: #{tpu_custom_call.1} parent=1 // pred_check_branch
      %9 = sbr.rel (0) target = $region5
    $region4: #{tpu_custom_call.1} parent=1 // pred_region
      %11 = vsyncadd [#allocation3], 0
      %s13 = sshll.u32 %s0, 4
      %s14 = int_to_ptr.hbm [resolvable:$true] %s13
      %s15 = sshll.u32 [#allocation2], 4
      %s16 = int_to_ptr.vmem [resolvable:$true] %s15
      %18 = dma.hbm_to_vmem [thread:$0]  %s14, 128, %s16, [#allocation3]
    $region5: #{tpu_custom_call.1} parent=1 // pred_fallthru
      _
    // Predicated region
    $region6: #{tpu_custom_call.1} parent=1 // pred_check
      _
    $region7: #{tpu_custom_call.1} parent=1 // pred_check_branch
      %20 = sbr.rel (0) target = $region9
    $region8: #{tpu_custom_call.1} parent=1 // pred_region
      %22 = dma.done [#allocation3], 128
    $region9: #{tpu_custom_call.1} parent=1 // pred_fallthru
      _
    %v23 = vld [vmem:[#allocation2] sm:$0xff]
    %v24 = vmul.f32 %v23, %v23
    %vm25 = vcmask 261120
    %v26 = vsel %vm25, %v24, 0.0
    %27 = vadd.xlane.f32.xlu0 %v26
    %v28 = vpop.xlane.xlu0 %27
    %v29 = vrsqrt.pop %v28
    %v30 = vmul.f32 %v29, %v28
    %v31 = vmul.f32 %v30, %v29
    %v32 = vmul.f32 0.5, %v31
    %v33 = vsub.f32 1.5, %v32
    %v34 = vmul.f32 %v29, %v33
    %vm35 = vweird.f32 %v28
    %vm36 = vweird.f32 %v29
    %vm37 = vmor %vm35, %vm36
    %v38 = vsel %vm37, %v29, %v34
    %v39 = vmul.f32 %v23, %v38
    %40 = vst.msk [vmem:[#allocation5] sm:$0xff] %vm25, %v39
    // Predicated region
    $region10: #{tpu_custom_call.1} parent=1 // pred_check
      _
    $region11: #{tpu_custom_call.1} parent=1 // pred_check_branch
      %42 = sbr.rel (0) target = $region13
    $region12: #{tpu_custom_call.1} parent=1 // pred_region
      %44 = vsyncadd [#allocation4], 0
      %s46 = sshll.u32 [#allocation5], 4
      %s47 = int_to_ptr.vmem [resolvable:$true] %s46
      %s48 = sshll.u32 %s1, 4
      %s49 = int_to_ptr.hbm [resolvable:$true] %s48
      %51 = dma.vmem_to_hbm [thread:$0]  %s47, 128, %s49, [#allocation4]
    $region13: #{tpu_custom_call.1} parent=1 // pred_fallthru
      _
    // Predicated region
    $region14: #{tpu_custom_call.1} parent=1 // pred_check
      _
    $region15: #{tpu_custom_call.1} parent=1 // pred_check_branch
      %53 = sbr.rel (0) target = $region17
    $region16: #{tpu_custom_call.1} parent=1 // pred_region
      %55 = dma.done [#allocation4], 128
    $region17: #{tpu_custom_call.1} parent=1 // pred_fallthru
      _
    %56 = vsyncpa [#allocation3], 1
    %57 = vsyncpa [#allocation4], 1

</llo_original>
